<compile_context>
chip_gen: v6e
topology: v6e:2x2x1
jax: 0.10.0
libtpu: 0.0.40
codegen_flags: <defaults>
</compile_context>

<pallas_src>
import functools

import jax
import jax.numpy as jnp
from jax.experimental import pallas as pl
from jax.experimental.pallas import tpu as pltpu


def _ce_gradpen_kernel(x_ref, w_ref, b_ref, tgt_ref, loss_ref,
                       ce_acc, dw_acc, *, alpha, inv_batch):
    i = pl.program_id(0)
    tb = x_ref.shape[0]

    # ---- zero the accumulators on the first batch tile ----
    @pl.when(i == 0)
    def _init():
        ce_acc[...] = jnp.zeros_like(ce_acc)
        dw_acc[...] = jnp.zeros_like(dw_acc)

    x = x_ref[...]          # [tb, d_pad]    bf16 (streamed, double-buffered)
    w = w_ref[...]          # [d_pad, c_pad] bf16 (resident, single VMEM copy)
    b = b_ref[...]          # [1, c_pad]     f32  (resident; padded classes get
                            #   a -1e30 bias -> b and the logits accumulator
                            #   MUST stay f32 for that masking to hold)
    start = pl.multiple_of(i * tb, tb)
    tgt = tgt_ref[pl.ds(start, tb), :]      # [tb, 1] int32 (resident, sliced)

    c = w.shape[1]

    # ---- forward: logits = x @ W + b (bf16 MXU feed, f32 accumulation) ----
    logits = jnp.dot(x, w, preferred_element_type=jnp.float32) + b   # [tb, c]

    # ---- stable log-sum-exp; no full log-softmax materialization ----
    m = jnp.max(logits, axis=-1, keepdims=True)                      # [tb, 1]
    ez = jnp.exp(logits - m)                                         # [tb, c]
    se = jnp.sum(ez, axis=-1, keepdims=True)                         # [tb, 1]

    classes = jax.lax.broadcasted_iota(jnp.int32, (tb, c), 1)
    is_tgt = classes == tgt                                          # [tb, c]
    tgt_logit = jnp.sum(jnp.where(is_tgt, logits, 0.0),
                        axis=-1, keepdims=True)                      # [tb, 1]

    # per-row CE contributions; the scalar reduce happens once in finalize
    ce_acc[...] += (m + jnp.log(se)) - tgt_logit                     # [tb, 1]

    # ---- analytic backward: dlogits = (softmax - onehot) / B, fused ----
    scale = inv_batch * pl.reciprocal(se, approx=True)               # EUP slot
    dlogits = ez * scale - jnp.where(is_tgt, inv_batch, 0.0)         # [tb, c]

    # dW += x^T @ dlogits, expressed as a contraction over the batch axis
    # (no explicit transpose).  x's extra ones-column makes dW[D, :] == db,
    # so the bias gradient rides along in the same matmul.
    dw_acc[...] += jax.lax.dot_general(
        x, dlogits.astype(jnp.bfloat16),
        dimension_numbers=(((0,), (0,)), ((), ())),
        preferred_element_type=jnp.float32)                          # [d_pad, c_pad]

    # ---- gradient penalty + combine, once, on the last batch tile ----
    @pl.when(i == pl.num_programs(0) - 1)
    def _finalize():
        dw = dw_acc[...]
        gnorm = jnp.sum(dw * dw)                 # covers dW and (folded) db
        ce_sum = jnp.sum(ce_acc[...], axis=0, keepdims=True)         # (1, 1)
        loss_ref[...] = ce_sum * inv_batch + alpha * gnorm


def _round_up(n, m):
    return ((n + m - 1) // m) * m


def _pick_tb(batch):
    # Largest batch tile <= 512 that divides B; floor of 16 keeps bf16 vregs
    # fully sublane-packed and gives the dW matmul a useful contraction depth.
    for tb in (512, 256, 128, 64, 32, 16):
        if batch % tb == 0:
            return tb
    return batch  # fall back to one full block (B not a multiple of 16)


def cross_entropy_with_gradient_penalty(x, w, b, targets, alpha, *, tb=None):
    """x:[B,D] f32, w:[D,C] f32, b:[C] f32, targets:[B] int, alpha: python float."""
    B, D = x.shape
    C = w.shape[1]

    # Lane-align the class axis; the feature axis gets one extra "ones" column
    # (index D) whose W row is zero, so logits are unchanged but dW[D,:] == db.
    d_pad = _round_up(D + 1, 128)
    c_pad = _round_up(C, 128)

    x = jnp.pad(x.astype(jnp.float32), ((0, 0), (0, d_pad - D)))
    x = x.at[:, D].set(1.0)                                   # bias feature
    w = jnp.pad(w.astype(jnp.float32), ((0, d_pad - D), (0, c_pad - C)))
    b = b.astype(jnp.float32)
    if c_pad != C:
        # padded classes masked to a huge negative logit via the f32 bias
        b = jnp.pad(b, (0, c_pad - C), constant_values=-1e30)

    tb = tb or _pick_tb(B)
    assert B % tb == 0, (B, tb)
    grid = (B // tb,)

    x_bf = x.astype(jnp.bfloat16)
    w_bf = w.astype(jnp.bfloat16)
    b2 = b.reshape(1, c_pad)
    tgt2 = targets.reshape(B, 1).astype(jnp.int32)

    kernel = functools.partial(_ce_gradpen_kernel,
                               alpha=float(alpha), inv_batch=float(1.0 / B))

    out = pl.pallas_call(
        kernel,
        out_shape=jax.ShapeDtypeStruct((1, 1), jnp.float32),
        grid_spec=pltpu.PrefetchScalarGridSpec(
            num_scalar_prefetch=0,
            grid=grid,
            in_specs=[
                pl.BlockSpec((tb, d_pad), lambda i: (i, 0)),             # x tile
                pl.BlockSpec(memory_space=pltpu.MemorySpace.VMEM),       # W resident
                pl.BlockSpec(memory_space=pltpu.MemorySpace.VMEM),       # b resident
                pl.BlockSpec(memory_space=pltpu.MemorySpace.VMEM),       # targets resident
            ],
            out_specs=pl.BlockSpec((1, 1), lambda i: (0, 0)),            # scalar loss
            scratch_shapes=[
                pltpu.VMEM((tb, 1), jnp.float32),                 # per-row CE acc
                pltpu.VMEM((d_pad, c_pad), jnp.float32),          # dW acc (row D == db)
            ],
        ),
        compiler_params=pltpu.CompilerParams(
            dimension_semantics=("arbitrary",),                   # batch reduction
            vmem_limit_bytes=48 * 1024 * 1024,                    # < v7x 64 MiB phys
        ),
    )(x_bf, w_bf, b2, tgt2)
    return out[0, 0]


def _reference(x, w, b, targets, alpha):
    """Pure-JAX f32 reference mirroring the PyTorch semantics (autodiff grads)."""
    def ce_fn(params):
        W, bb = params
        logits = x @ W + bb[None, :]
        logp = jax.nn.log_softmax(logits, axis=-1)
        return -jnp.mean(jnp.take_along_axis(logp, targets[:, None], axis=1))

    params = (w, b)
    ce = ce_fn(params)
    grads = jax.grad(ce_fn)(params)
    gnorm = sum(jnp.sum(g * g) for g in jax.tree_util.tree_leaves(grads))
    return ce + alpha * gnorm


if __name__ == "__main__":
    # Small but lane-aligned shapes: 32 rows, 128 features, 128 classes.
    B, D, C = 32, 128, 128

    key = jax.random.PRNGKey(0)
    kx, kw, kb, kt = jax.random.split(key, 4)

    x = jax.random.normal(kx, (B, D), dtype=jnp.float32)
    # deterministic synthetic "model" parameters
    w = jax.random.normal(kw, (D, C), dtype=jnp.float32) * 0.1
    b = jax.random.normal(kb, (C,), dtype=jnp.float32) * 0.05
    targets = jax.random.randint(kt, (B,), 0, C, dtype=jnp.int32)

    # alpha_schedule + one step() -> alpha = schedule[0]
    alpha_schedule = [0.1, 0.2, 0.5]
    alpha = alpha_schedule[0]

    # tb=16 -> 2 grid steps (respects the 16-row floor), exercising the
    # init / accumulate / finalize pipeline path on a tiny problem.
    loss = cross_entropy_with_gradient_penalty(x, w, b, targets, alpha, tb=16)
    loss = jax.block_until_ready(loss)

    ref = jax.block_until_ready(_reference(x, w, b, targets, alpha))
    # bf16 MXU inputs + approx reciprocal => looser tolerance than pure f32.
    tol = 3e-2 * max(1.0, abs(float(ref)))
    assert abs(float(loss) - float(ref)) < tol, (float(loss), float(ref))

    print("KERNEL_OK")
</pallas_src>

<mosaic_0001>
module attributes {stable_mosaic.version = 11 : i64} {
  func.func @_ce_gradpen_kernel(%arg0: i32, %arg1: memref<16x256xbf16, #tpu.memory_space<vmem>>, %arg2: memref<256x128xbf16, #tpu.memory_space<vmem>>, %arg3: memref<1x128xf32, #tpu.memory_space<vmem>>, %arg4: memref<32x1xi32, #tpu.memory_space<vmem>>, %arg5: memref<1x1xf32, #tpu.memory_space<vmem>>, %arg6: memref<16x1xf32, #tpu.memory_space<vmem>>, %arg7: memref<256x128xf32, #tpu.memory_space<vmem>>) attributes {dimension_semantics = [#tpu.dimension_semantics<arbitrary>], iteration_bounds = array<i64: 2>, scalar_prefetch = 0 : i64, scratch_operands = 2 : i64, tpu.core_type = #tpu.core_type<tc>, window_params = [{transform_indices = @transform_0, window_bounds = array<i64: 16, 256>}, {pipeline_mode = #tpu.pipeline_mode<synchronous>, transform_indices = @transform_1, window_bounds = array<i64: 256, 128>}, {pipeline_mode = #tpu.pipeline_mode<synchronous>, transform_indices = @transform_2, window_bounds = array<i64: 1, 128>}, {pipeline_mode = #tpu.pipeline_mode<synchronous>, transform_indices = @transform_3, window_bounds = array<i64: 32, 1>}, {pipeline_mode = #tpu.pipeline_mode<synchronous>, transform_indices = @transform_4, window_bounds = array<i64: 1, 1>}]} {
    %c0_i32 = arith.constant 0 : i32
    %0 = arith.cmpi eq, %arg0, %c0_i32 : i32
    %1 = arith.extui %0 : i1 to i32
    %c0_i32_0 = arith.constant 0 : i32
    %2 = arith.cmpi ne, %1, %c0_i32_0 : i32
    scf.if %2 {
      %cst_24 = arith.constant 0.000000e+00 : f32
      %50 = vector.broadcast %cst_24 : f32 to vector<16x1xf32>
      %c0_25 = arith.constant 0 : index
      %c0_26 = arith.constant 0 : index
      %51 = vector.load %arg6[%c0_25, %c0_26] : memref<16x1xf32, #tpu.memory_space<vmem>>, vector<16x1xf32>
      tpu.vector_store %arg6[%c0_25, %c0_26], %50 {strides = array<i32>} : memref<16x1xf32, #tpu.memory_space<vmem>>, vector<16x1xf32>,
      %cst_27 = arith.constant 0.000000e+00 : f32
      %52 = vector.broadcast %cst_27 : f32 to vector<256x128xf32>
      %c0_28 = arith.constant 0 : index
      %c0_29 = arith.constant 0 : index
      %53 = vector.load %arg7[%c0_28, %c0_29] : memref<256x128xf32, #tpu.memory_space<vmem>>, vector<256x128xf32>
      tpu.vector_store %arg7[%c0_28, %c0_29], %52 {strides = array<i32>} : memref<256x128xf32, #tpu.memory_space<vmem>>, vector<256x128xf32>,
    } else {
    }
    %c0 = arith.constant 0 : index
    %c0_1 = arith.constant 0 : index
    %3 = vector.load %arg1[%c0, %c0_1] : memref<16x256xbf16, #tpu.memory_space<vmem>>, vector<16x256xbf16>
    %c0_2 = arith.constant 0 : index
    %c0_3 = arith.constant 0 : index
    %4 = vector.load %arg2[%c0_2, %c0_3] : memref<256x128xbf16, #tpu.memory_space<vmem>>, vector<256x128xbf16>
    %c0_4 = arith.constant 0 : index
    %c0_5 = arith.constant 0 : index
    %5 = vector.load %arg3[%c0_4, %c0_5] : memref<1x128xf32, #tpu.memory_space<vmem>>, vector<1x128xf32>
    %c16_i32 = arith.constant 16 : i32
    %6 = arith.muli %arg0, %c16_i32 : i32
    %7 = tpu.assume_multiple %6, 16 : i32
    %8 = arith.index_cast %7 : i32 to index
    %c0_6 = arith.constant 0 : index
    %9 = vector.load %arg4[%8, %c0_6] : memref<32x1xi32, #tpu.memory_space<vmem>>, vector<16x1xi32>
    %cst = arith.constant dense<0.000000e+00> : vector<16x128xf32>
    %10 = tpu.matmul %3, %4, %cst {dimension_numbers = #tpu.dot_dimension_numbers<[1], [0], [0], [1], [0, 0, 1, 1], [], []>} : vector<16x256xbf16>, vector<256x128xbf16>, vector<16x128xf32> -> vector<16x128xf32>
    %11 = vector.broadcast %5 : vector<1x128xf32> to vector<16x128xf32>
    %12 = arith.addf %10, %11 : vector<16x128xf32>
    %cst_7 = arith.constant dense<0xFF800000> : vector<16xf32>
    %13 = vector.multi_reduction <maximumf>, %12, %cst_7 [1] : vector<16x128xf32> to vector<16xf32>
    %14 = vector.shape_cast %13 : vector<16xf32> to vector<16x1xf32>
    %15 = vector.broadcast %14 : vector<16x1xf32> to vector<16x128xf32>
    %16 = arith.subf %12, %15 : vector<16x128xf32>
    %17 = math.exp %16 : vector<16x128xf32>
    %cst_8 = arith.constant dense<0.000000e+00> : vector<16xf32>
    %18 = vector.multi_reduction <add>, %17, %cst_8 [1] : vector<16x128xf32> to vector<16xf32>
    %19 = vector.shape_cast %18 : vector<16xf32> to vector<16x1xf32>
    %20 = tpu.iota {dimensions = array<i32: 1>} : vector<16x128xi32>
    %21 = vector.broadcast %9 : vector<16x1xi32> to vector<16x128xi32>
    %22 = arith.cmpi eq, %20, %21 : vector<16x128xi32>
    %cst_9 = arith.constant 0.000000e+00 : f32
    %23 = vector.broadcast %cst_9 : f32 to vector<16x128xf32>
    %24 = arith.select %22, %12, %23 : vector<16x128xi1>, vector<16x128xf32>
    %cst_10 = arith.constant dense<0.000000e+00> : vector<16xf32>
    %25 = vector.multi_reduction <add>, %24, %cst_10 [1] : vector<16x128xf32> to vector<16xf32>
    %26 = vector.shape_cast %25 : vector<16xf32> to vector<16x1xf32>
    %c0_11 = arith.constant 0 : index
    %c0_12 = arith.constant 0 : index
    %27 = vector.load %arg6[%c0_11, %c0_12] : memref<16x1xf32, #tpu.memory_space<vmem>>, vector<16x1xf32>
    %28 = math.log %19 : vector<16x1xf32>
    %29 = arith.addf %14, %28 : vector<16x1xf32>
    %30 = arith.subf %29, %26 : vector<16x1xf32>
    %31 = arith.addf %27, %30 : vector<16x1xf32>
    %c0_13 = arith.constant 0 : index
    %c0_14 = arith.constant 0 : index
    %32 = vector.load %arg6[%c0_13, %c0_14] : memref<16x1xf32, #tpu.memory_space<vmem>>, vector<16x1xf32>
    tpu.vector_store %arg6[%c0_13, %c0_14], %31 {strides = array<i32>} : memref<16x1xf32, #tpu.memory_space<vmem>>, vector<16x1xf32>,
    %33 = tpu.reciprocal %19 {approx = true} : vector<16x1xf32> -> vector<16x1xf32>
    %cst_15 = arith.constant 3.125000e-02 : f32
    %34 = vector.broadcast %cst_15 : f32 to vector<16x1xf32>
    %35 = arith.mulf %34, %33 : vector<16x1xf32>
    %36 = vector.broadcast %35 : vector<16x1xf32> to vector<16x128xf32>
    %37 = arith.mulf %17, %36 : vector<16x128xf32>
    %cst_16 = arith.constant 3.125000e-02 : f32
    %cst_17 = arith.constant 0.000000e+00 : f32
    %38 = vector.broadcast %cst_16 : f32 to vector<16x128xf32>
    %39 = vector.broadcast %cst_17 : f32 to vector<16x128xf32>
    %40 = arith.select %22, %38, %39 : vector<16x128xi1>, vector<16x128xf32>
    %41 = arith.subf %37, %40 : vector<16x128xf32>
    %c0_18 = arith.constant 0 : index
    %c0_19 = arith.constant 0 : index
    %42 = vector.load %arg7[%c0_18, %c0_19] : memref<256x128xf32, #tpu.memory_space<vmem>>, vector<256x128xf32>
    %43 = arith.truncf %41 : vector<16x128xf32> to vector<16x128xbf16>
    %cst_20 = arith.constant dense<0.000000e+00> : vector<256x128xf32>
    %44 = tpu.matmul %3, %43, %cst_20 {dimension_numbers = #tpu.dot_dimension_numbers<[0], [0], [1], [1], [0, 1, 1, 1], [], []>} : vector<16x256xbf16>, vector<16x128xbf16>, vector<256x128xf32> -> vector<256x128xf32>
    %45 = arith.addf %42, %44 : vector<256x128xf32>
    %c0_21 = arith.constant 0 : index
    %c0_22 = arith.constant 0 : index
    %46 = vector.load %arg7[%c0_21, %c0_22] : memref<256x128xf32, #tpu.memory_space<vmem>>, vector<256x128xf32>
    tpu.vector_store %arg7[%c0_21, %c0_22], %45 {strides = array<i32>} : memref<256x128xf32, #tpu.memory_space<vmem>>, vector<256x128xf32>,
    %c1_i32 = arith.constant 1 : i32
    %47 = arith.cmpi eq, %arg0, %c1_i32 : i32
    %48 = arith.extui %47 : i1 to i32
    %c0_i32_23 = arith.constant 0 : i32
    %49 = arith.cmpi ne, %48, %c0_i32_23 : i32
    scf.if %49 {
      %c0_24 = arith.constant 0 : index
      %c0_25 = arith.constant 0 : index
      %50 = vector.load %arg7[%c0_24, %c0_25] : memref<256x128xf32, #tpu.memory_space<vmem>>, vector<256x128xf32>
      %51 = arith.mulf %50, %50 : vector<256x128xf32>
      %52 = vector.shape_cast %51 : vector<256x128xf32> to vector<1x256x128xf32>
      %cst_26 = arith.constant dense<0.000000e+00> : vector<1xf32>
      %53 = vector.multi_reduction <add>, %52, %cst_26 [1, 2] : vector<1x256x128xf32> to vector<1xf32>
      %54 = vector.shape_cast %53 : vector<1xf32> to vector<1x1x1xf32>
      %55 = vector.extract %54[0, 0, 0] : f32 from vector<1x1x1xf32>
      %c0_27 = arith.constant 0 : index
      %c0_28 = arith.constant 0 : index
      %56 = vector.load %arg6[%c0_27, %c0_28] : memref<16x1xf32, #tpu.memory_space<vmem>>, vector<16x1xf32>
      %cst_29 = arith.constant dense<0.000000e+00> : vector<1xf32>
      %57 = vector.multi_reduction <add>, %56, %cst_29 [0] : vector<16x1xf32> to vector<1xf32>
      %58 = vector.shape_cast %57 : vector<1xf32> to vector<1x1xf32>
      %cst_30 = arith.constant 3.125000e-02 : f32
      %59 = vector.broadcast %cst_30 : f32 to vector<1x1xf32>
      %60 = arith.mulf %58, %59 : vector<1x1xf32>
      %cst_31 = arith.constant 1.000000e-01 : f32
      %61 = arith.mulf %cst_31, %55 : f32
      %62 = vector.broadcast %61 : f32 to vector<1x1xf32>
      %63 = arith.addf %60, %62 : vector<1x1xf32>
      %c0_32 = arith.constant 0 : index
      %c0_33 = arith.constant 0 : index
      %64 = vector.load %arg5[%c0_32, %c0_33] : memref<1x1xf32, #tpu.memory_space<vmem>>, vector<1x1xf32>
      tpu.vector_store %arg5[%c0_32, %c0_33], %63 {strides = array<i32>} : memref<1x1xf32, #tpu.memory_space<vmem>>, vector<1x1xf32>,
    } else {
    }
    return
  }
  func.func @transform_0(%arg0: i32) -> (i32, i32) {
    %c0_i32 = arith.constant 0 : i32
    %c0_i32_0 = arith.constant 0 : i32
    return %arg0, %c0_i32 : i32, i32
  }
  func.func @transform_1(%arg0: i32) -> (i32, i32) {
    %c0_i32 = arith.constant 0 : i32
    %c0_i32_0 = arith.constant 0 : i32
    %c0_i32_1 = arith.constant 0 : i32
    return %c0_i32, %c0_i32_0 : i32, i32
  }
  func.func @transform_2(%arg0: i32) -> (i32, i32) {
    %c0_i32 = arith.constant 0 : i32
    %c0_i32_0 = arith.constant 0 : i32
    %c0_i32_1 = arith.constant 0 : i32
    return %c0_i32, %c0_i32_0 : i32, i32
  }
  func.func @transform_3(%arg0: i32) -> (i32, i32) {
    %c0_i32 = arith.constant 0 : i32
    %c0_i32_0 = arith.constant 0 : i32
    %c0_i32_1 = arith.constant 0 : i32
    return %c0_i32, %c0_i32_0 : i32, i32
  }
  func.func @transform_4(%arg0: i32) -> (i32, i32) {
    %c0_i32 = arith.constant 0 : i32
    %c0_i32_0 = arith.constant 0 : i32
    %c0_i32_1 = arith.constant 0 : i32
    return %c0_i32, %c0_i32_0 : i32, i32
  }
}

</mosaic_0001>

<llo_original>
// kernel: tpu_custom_call.1
$region0: #{tpu_custom_call.1}
  #allocation0 [shape = 'u32[]', space=smem, size = 0x4, offset = 0x4, fixed_abs, tag = 'smem constant byte address 0x4 - core index']
  #allocation1 [shape = 'u32[144,128]{1,0:T(1,128)}', space=vmem, size = 0x12000, scoped, tag = 'internal scratch']
  #allocation2 [shape = 'f32[16,1]{1,0:T(8,128)}', space=vmem, size = 0x2000, scoped, tag = 'scratch operand']
  #allocation3 [shape = 'f32[256,128]{1,0:T(8,128)}', space=vmem, size = 0x20000, scoped, tag = 'scratch operand']
  %s0 = inlined_call_operand.vmem [shape: bf16[32,256], index: 0, kind: input, shape index: {}]
  %s1 = inlined_call_operand.hbm [shape: bf16[256,128], index: 1, kind: input, shape index: {}]
  %s2 = inlined_call_operand.vmem [shape: f32[1,128], index: 2, kind: input, shape index: {}]
  %s3 = inlined_call_operand.vmem [shape: s32[32,1], index: 3, kind: input, shape index: {}]
  %s4 = inlined_call_operand.hbm [shape: f32[1,1], index: 4, kind: output, shape index: {}]
  %s5 = sld [smem:[#allocation0]]
  $region61: #{tpu_custom_call.1} parent=0
    _
  %s7 = ssub.s32 1, %s5
  %s8 = scalar_select 0, %s7, %s5
  $region1: #{tpu_custom_call.1} parent=0
    #allocation4 [shape = 'u8[65536]{0}', space=vmem, size = 0x10000, scoped, tag = 'input window, operand 1, single buffered']
    #allocation5 [shape = 's32[2]{0}', space=sflag, size = 0x8, scoped, tag = 'scoped memory for tpu_custom_call.1']
    #allocation6 [shape = 's32[2]{0}', space=sflag, size = 0x8, scoped, tag = 'scoped memory for tpu_custom_call.1']
    #allocation7 [shape = 'u8[512]{0}', space=vmem, size = 0x400, scoped, tag = 'output window, operand 0, single buffered']
    %9 = vsyncpa [#allocation5], 0
    %10 = vsyncpa [#allocation6], 0
    loop: start=0, step=1, limit=4
    $region2: #{tpu_custom_call.1} parent=1 // loop_pre_header
      _
    $region3: #{tpu_custom_call.1} parent=1 // loop_header
      %s12 = sphi 0, %s16
      %p13 = scmp.ge.s32.totalorder %s12, 4
      %s22 = sphi 0, %s24
      %s25 = sphi 0, %s22
      %s26 = sphi 0, %s25
      %s42 = sphi 0, %s26
      %s46 = sphi 0, %s46
      %s48 = sphi 0, %s46
      %s49 = sphi 0, %s48
      %s63 = sphi 0, %s49
      %s67 = sphi 0, %s67
      %s69 = sphi 0, %s67
      %s70 = sphi 0, %s69
      %s84 = sphi 0, %s70
      %s88 = sphi 0, %s88
      %s90 = sphi 0, %s88
      %s91 = sphi 0, %s90
      %s105 = sphi 0, %s91
      %s109 = sphi 0, %s109
      %s111 = sphi 0, %s109
      %s112 = sphi 0, %s111
      %s126 = sphi 0, %s112
    $region4: #{tpu_custom_call.1} parent=1 // loop_header_branch
      %15 = sbr.rel (%p13) target = $region8
    $region5: #{tpu_custom_call.1} parent=1 // loop_body
      %s17 = ssub.s32 %s12, 1
      %s18 = ssub.s32 %s12, 2
      %s19 = sadd.s32 %s12, 1
      %s20 = ssub.s32 %s12, %s19
      %p21 = scmp.eq.s32.totalorder %s20, 0
      %s23 = sadd.s32 %s22, 1
      %s24 = scalar_select %p21, %s22, %s23
      %p27 = pneg %p21
      %p28 = scmp.eq.s32.totalorder %s12, 1
      %p29 = por %p27, %p28
      %p30 = scmp.ne.s32.totalorder %s22, %s25
      %p31 = scmp.eq.s32.totalorder %s12, 0
      %p32 = por %p30, %p31
      %p33 = scmp.ne.s32.totalorder %s22, %s25
      %p34 = scmp.eq.s32.totalorder %s17, 1
      %p35 = por %p33, %p34
      %p36 = scmp.ne.s32.totalorder %s25, %s26
      %p37 = scmp.eq.s32.totalorder %s17, 0
      %p38 = por %p36, %p37
      %p39 = scmp.ne.s32.totalorder %s25, %s26
      %p40 = scmp.eq.s32.totalorder %s18, 1
      %p41 = por %p39, %p40
      %p43 = scmp.ne.s32.totalorder %s26, %s42
      %p44 = scmp.eq.s32.totalorder %s18, 0
      %p45 = por %p43, %p44
      %s47 = sadd.s32 %s46, 1
      %p50 = scmp.eq.s32.totalorder %s12, 1
      %p51 = scmp.ne.s32.totalorder %s46, %s48
      %p52 = scmp.eq.s32.totalorder %s12, 0
      %p53 = por %p51, %p52
      %p54 = scmp.ne.s32.totalorder %s46, %s48
      %p55 = scmp.eq.s32.totalorder %s17, 1
      %p56 = por %p54, %p55
      %p57 = scmp.ne.s32.totalorder %s48, %s49
      %p58 = scmp.eq.s32.totalorder %s17, 0
      %p59 = por %p57, %p58
      %p60 = scmp.ne.s32.totalorder %s48, %s49
      %p61 = scmp.eq.s32.totalorder %s18, 1
      %p62 = por %p60, %p61
      %p64 = scmp.ne.s32.totalorder %s49, %s63
      %p65 = scmp.eq.s32.totalorder %s18, 0
      %p66 = por %p64, %p65
      %s68 = sadd.s32 %s67, 1
      %p71 = scmp.eq.s32.totalorder %s12, 1
      %p72 = scmp.ne.s32.totalorder %s67, %s69
      %p73 = scmp.eq.s32.totalorder %s12, 0
      %p74 = por %p72, %p73
      %p75 = scmp.ne.s32.totalorder %s67, %s69
      %p76 = scmp.eq.s32.totalorder %s17, 1
      %p77 = por %p75, %p76
      %p78 = scmp.ne.s32.totalorder %s69, %s70
      %p79 = scmp.eq.s32.totalorder %s17, 0
      %p80 = por %p78, %p79
      %p81 = scmp.ne.s32.totalorder %s69, %s70
      %p82 = scmp.eq.s32.totalorder %s18, 1
      %p83 = por %p81, %p82
      %p85 = scmp.ne.s32.totalorder %s70, %s84
      %p86 = scmp.eq.s32.totalorder %s18, 0
      %p87 = por %p85, %p86
      %s89 = sadd.s32 %s88, 1
      %p92 = scmp.eq.s32.totalorder %s12, 1
      %p93 = scmp.ne.s32.totalorder %s88, %s90
      %p94 = scmp.eq.s32.totalorder %s12, 0
      %p95 = por %p93, %p94
      %p96 = scmp.ne.s32.totalorder %s88, %s90
      %p97 = scmp.eq.s32.totalorder %s17, 1
      %p98 = por %p96, %p97
      %p99 = scmp.ne.s32.totalorder %s90, %s91
      %p100 = scmp.eq.s32.totalorder %s17, 0
      %p101 = por %p99, %p100
      %p102 = scmp.ne.s32.totalorder %s90, %s91
      %p103 = scmp.eq.s32.totalorder %s18, 1
      %p104 = por %p102, %p103
      %p106 = scmp.ne.s32.totalorder %s91, %s105
      %p107 = scmp.eq.s32.totalorder %s18, 0
      %p108 = por %p106, %p107
      %s110 = sadd.s32 %s109, 1
      %p113 = scmp.eq.s32.totalorder %s12, 1
      %p114 = scmp.ne.s32.totalorder %s109, %s111
      %p115 = scmp.eq.s32.totalorder %s12, 0
      %p116 = por %p114, %p115
      %p117 = scmp.ne.s32.totalorder %s109, %s111
      %p118 = scmp.eq.s32.totalorder %s17, 1
      %p119 = por %p117, %p118
      %p120 = scmp.ne.s32.totalorder %s111, %s112
      %p121 = scmp.eq.s32.totalorder %s17, 0
      %p122 = por %p120, %p121
      %p123 = scmp.ne.s32.totalorder %s111, %s112
      %p124 = scmp.eq.s32.totalorder %s18, 1
      %p125 = por %p123, %p124
      %p127 = scmp.ne.s32.totalorder %s112, %s126
      %p128 = scmp.eq.s32.totalorder %s18, 0
      %p129 = por %p127, %p128
      %p130 = scmp.le.s32.totalorder 1, %s12
      %p131 = scmp.lt.s32.totalorder %s12, 3
      %p132 = pnand %p130, %p131
      %p133 = pneg %p132
      // Predicated region
      $region9: #{tpu_custom_call.1} parent=5 // pred_check
        _
      $region10: #{tpu_custom_call.1} parent=5 // pred_check_branch
        %135 = sbr.rel (%p132) target = $region12
      $region11: #{tpu_custom_call.1} parent=5 // pred_region
        %s136 = ssub.s32 %s12, 1
        // Predicated region
        $region13: #{tpu_custom_call.1} parent=11 // pred_check
          %p137 = pneg %p59
        $region14: #{tpu_custom_call.1} parent=11 // pred_check_branch
          %139 = sbr.rel (%p137) target = $region16
        $region15: #{tpu_custom_call.1} parent=11 // pred_region
          %s141 = ssub.s32 2048, 2048
          %142 = vsyncadd [#allocation5], %s141
          %s143 = sshll.u32 [#allocation4], 4
          %s144 = int_to_ptr.vmem [resolvable:$true] %s143
          %149 = dma.hbm_to_vmem [thread:$0]  %s1, 2048, %s144, [#allocation5], 64, 64, 4
        $region16: #{tpu_custom_call.1} parent=11 // pred_fallthru
          _
        // Predicated region
        $region17: #{tpu_custom_call.1} parent=11 // pred_check
          %p150 = pneg %p80
        $region18: #{tpu_custom_call.1} parent=11 // pred_check_branch
          %152 = sbr.rel (%p150) target = $region20
        $region19: #{tpu_custom_call.1} parent=11 // pred_region
          _
        $region20: #{tpu_custom_call.1} parent=11 // pred_fallthru
          _
        // Predicated region
        $region21: #{tpu_custom_call.1} parent=11 // pred_check
          %p153 = pneg %p101
        $region22: #{tpu_custom_call.1} parent=11 // pred_check_branch
          %155 = sbr.rel (%p153) target = $region24
        $region23: #{tpu_custom_call.1} parent=11 // pred_region
          _
        $region24: #{tpu_custom_call.1} parent=11 // pred_fallthru
          _
      $region12: #{tpu_custom_call.1} parent=5 // pred_fallthru
        _
      %p156 = scmp.lt.s32.totalorder %s12, 2
      // Predicated region
      $region25: #{tpu_custom_call.1} parent=5 // pred_check
        %p157 = pneg %p156
      $region26: #{tpu_custom_call.1} parent=5 // pred_check_branch
        %159 = sbr.rel (%p157) target = $region28
      $region27: #{tpu_custom_call.1} parent=5 // pred_region
        // Predicated region
        $region29: #{tpu_custom_call.1} parent=27 // pred_check
          %p160 = pneg %p32
        $region30: #{tpu_custom_call.1} parent=27 // pred_check_branch
          %162 = sbr.rel (%p160) target = $region32
        $region31: #{tpu_custom_call.1} parent=27 // pred_region
          %s163 = smul.u32 2, %s12
          %p164 = scmp.lt.s32.totalorder %s163, 3
          %s165 = scalar_select %p164, %s163, 3
          %s166 = smul.addr %s165, 2
          %s167 = smul.addr %s166, 4
          %s168 = scalar_lea.vmem %s0, %s167
          %s169 = smul.u32 2, %s12
        $region32: #{tpu_custom_call.1} parent=27 // pred_fallthru
          _
      $region28: #{tpu_custom_call.1} parent=5 // pred_fallthru
        _
      %p170 = scmp.le.s32.totalorder 1, %s12
      %p171 = scmp.lt.s32.totalorder %s12, 3
      %p172 = pnand %p170, %p171
      %p173 = pneg %p172
      // Predicated region
      $region33: #{tpu_custom_call.1} parent=5 // pred_check
        _
      $region34: #{tpu_custom_call.1} parent=5 // pred_check_branch
        %175 = sbr.rel (%p172) target = $region36
      $region35: #{tpu_custom_call.1} parent=5 // pred_region
        %s176 = ssub.s32 %s12, 1
        // Predicated region
        $region37: #{tpu_custom_call.1} parent=35 // pred_check
          %p177 = pneg %p59
        $region38: #{tpu_custom_call.1} parent=35 // pred_check_branch
          %179 = sbr.rel (%p177) target = $region40
        $region39: #{tpu_custom_call.1} parent=35 // pred_region
          %180 = dma.done [#allocation5], 2048
        $region40: #{tpu_custom_call.1} parent=35 // pred_fallthru
          _
        %s181 = smul.u32 2, %s17
        %p182 = scmp.lt.s32.totalorder %s181, 3
        %s183 = scalar_select %p182, %s181, 3
        %s184 = smul.addr %s183, 2
        %s185 = smul.addr %s184, 4
        %s186 = scalar_lea.vmem %s0, %s185
        %p187 = pneg %p38
        %p188 = pneg %p35
        %p189 = pneg %p59
        %p190 = pneg %p56
        %p191 = pneg %p80
        %p192 = pneg %p77
        %p193 = pneg %p101
        %p194 = pneg %p98
        %p195 = pneg %p122
        %p196 = pneg %p119
        %s197 = smul.u32 2, %s17
        %p198 = scmp.lt.s32.totalorder %s197, 3
        %s199 = scalar_select %p198, %s197, 3
        %s200 = smul.addr %s199, 2
        %s201 = smul.addr %s200, 4
        %s202 = scalar_lea.vmem %s0, %s201
        %s203 = smul.u32 2, %s17
        %p205 = scmp.eq.s32.totalorder %s17, 0
        // Predicated region
        $region41: #{tpu_custom_call.1} parent=35 // pred_check
          %p206 = pneg %p205
        $region42: #{tpu_custom_call.1} parent=35 // pred_check_branch
          %208 = sbr.rel (%p206) target = $region44
        $region43: #{tpu_custom_call.1} parent=35 // pred_region
          %vm209 = vcmask 7168
          %210 = vst.msk [vmem:[#allocation2] sm:$0xff] %vm209, 0.0
          %211 = vst.msk [vmem:[#allocation2 + $0x8] sm:$0xff] %vm209, 0.0
          %212 = vst [vmem:[#allocation3] sm:$0xff] 0.0
          %213 = vst [vmem:[#allocation3 + $0x8] sm:$0xff] 0.0
          %214 = vst [vmem:[#allocation3 + $0x10] sm:$0xff] 0.0
          %215 = vst [vmem:[#allocation3 + $0x18] sm:$0xff] 0.0
          %216 = vst [vmem:[#allocation3 + $0x20] sm:$0xff] 0.0
          %217 = vst [vmem:[#allocation3 + $0x28] sm:$0xff] 0.0
          %218 = vst [vmem:[#allocation3 + $0x30] sm:$0xff] 0.0
          %219 = vst [vmem:[#allocation3 + $0x38] sm:$0xff] 0.0
          %220 = vst [vmem:[#allocation3 + $0x40] sm:$0xff] 0.0
          %221 = vst [vmem:[#allocation3 + $0x48] sm:$0xff] 0.0
          %222 = vst [vmem:[#allocation3 + $0x50] sm:$0xff] 0.0
          %223 = vst [vmem:[#allocation3 + $0x58] sm:$0xff] 0.0
          %224 = vst [vmem:[#allocation3 + $0x60] sm:$0xff] 0.0
          %225 = vst [vmem:[#allocation3 + $0x68] sm:$0xff] 0.0
          %226 = vst [vmem:[#allocation3 + $0x70] sm:$0xff] 0.0
          %227 = vst [vmem:[#allocation3 + $0x78] sm:$0xff] 0.0
          %228 = vst [vmem:[#allocation3 + $0x80] sm:$0xff] 0.0
          %229 = vst [vmem:[#allocation3 + $0x88] sm:$0xff] 0.0
          %230 = vst [vmem:[#allocation3 + $0x90] sm:$0xff] 0.0
          %231 = vst [vmem:[#allocation3 + $0x98] sm:$0xff] 0.0
          %232 = vst [vmem:[#allocation3 + $0xa0] sm:$0xff] 0.0
          %233 = vst [vmem:[#allocation3 + $0xa8] sm:$0xff] 0.0
          %234 = vst [vmem:[#allocation3 + $0xb0] sm:$0xff] 0.0
          %235 = vst [vmem:[#allocation3 + $0xb8] sm:$0xff] 0.0
          %236 = vst [vmem:[#allocation3 + $0xc0] sm:$0xff] 0.0
          %237 = vst [vmem:[#allocation3 + $0xc8] sm:$0xff] 0.0
          %238 = vst [vmem:[#allocation3 + $0xd0] sm:$0xff] 0.0
          %239 = vst [vmem:[#allocation3 + $0xd8] sm:$0xff] 0.0
          %240 = vst [vmem:[#allocation3 + $0xe0] sm:$0xff] 0.0
          %241 = vst [vmem:[#allocation3 + $0xe8] sm:$0xff] 0.0
          %242 = vst [vmem:[#allocation3 + $0xf0] sm:$0xff] 0.0
          %243 = vst [vmem:[#allocation3 + $0xf8] sm:$0xff] 0.0
        $region44: #{tpu_custom_call.1} parent=35 // pred_fallthru
          _
        %v244 = vld [vmem:[%s202] sm:$0xff]
        %v245 = vld [vmem:[%s202 + $0x8] sm:$0xff]
        %v246 = vld [vmem:[#allocation4] sm:$0xf]
        %v247 = vld [vmem:[#allocation4 + $0x4] sm:$0xf]
        %v248 = vld [vmem:[#allocation4 + $0x8] sm:$0xf]
        %v249 = vld [vmem:[#allocation4 + $0xc] sm:$0xf]
        %v250 = vld [vmem:[#allocation4 + $0x10] sm:$0xf]
        %v251 = vld [vmem:[#allocation4 + $0x14] sm:$0xf]
        %v252 = vld [vmem:[#allocation4 + $0x18] sm:$0xf]
        %v253 = vld [vmem:[#allocation4 + $0x1c] sm:$0xf]
        %v254 = vld [vmem:[#allocation4 + $0x20] sm:$0xf]
        %v255 = vld [vmem:[#allocation4 + $0x24] sm:$0xf]
        %v256 = vld [vmem:[#allocation4 + $0x28] sm:$0xf]
        %v257 = vld [vmem:[#allocation4 + $0x2c] sm:$0xf]
        %v258 = vld [vmem:[#allocation4 + $0x30] sm:$0xf]
        %v259 = vld [vmem:[#allocation4 + $0x34] sm:$0xf]
        %v260 = vld [vmem:[#allocation4 + $0x38] sm:$0xf]
        %v261 = vld [vmem:[#allocation4 + $0x3c] sm:$0xf]
        %v262 = vld [vmem:[#allocation4 + $0x40] sm:$0xf]
        %v263 = vld [vmem:[#allocation4 + $0x44] sm:$0xf]
        %v264 = vld [vmem:[#allocation4 + $0x48] sm:$0xf]
        %v265 = vld [vmem:[#allocation4 + $0x4c] sm:$0xf]
        %v266 = vld [vmem:[#allocation4 + $0x50] sm:$0xf]
        %v267 = vld [vmem:[#allocation4 + $0x54] sm:$0xf]
        %v268 = vld [vmem:[#allocation4 + $0x58] sm:$0xf]
        %v269 = vld [vmem:[#allocation4 + $0x5c] sm:$0xf]
        %v270 = vld [vmem:[#allocation4 + $0x60] sm:$0xf]
        %v271 = vld [vmem:[#allocation4 + $0x64] sm:$0xf]
        %v272 = vld [vmem:[#allocation4 + $0x68] sm:$0xf]
        %v273 = vld [vmem:[#allocation4 + $0x6c] sm:$0xf]
        %v274 = vld [vmem:[#allocation4 + $0x70] sm:$0xf]
        %v275 = vld [vmem:[#allocation4 + $0x74] sm:$0xf]
        %v276 = vld [vmem:[#allocation4 + $0x78] sm:$0xf]
        %v277 = vld [vmem:[#allocation4 + $0x7c] sm:$0xf]
        %v278 = vld [vmem:[%s2] sm:$0x1]
        %s279 = smul.u32 %s17, 16
        %s280 = scalar_lea.vmem %s3, %s279
        %v281 = vld [vmem:[%s280] sm:$0xff]
        %v282 = vld [vmem:[%s280 + $0x8] sm:$0xff]
        %v284 = vlaneseq
        %v285 = vshrl.u32 %v284, 7
        %v286 = vsub.s32 0, %v285
        %v287 = vrot.slane %v278, %v286
        %v291 = vunpack.c.l.b16 %v244
        %v292 = vunpack.c.h.b16 %v244
        %v293 = vunpack.c.l.b16 %v245
        %v294 = vunpack.c.h.b16 %v245
        %v295 = vpack.c.b16 %v293, %v291
        %v296 = vpack.c.b16 %v294, %v292
        %v331 = vunpack.c.l.b16 %v246
        %v332 = vunpack.c.l.b16 %v247
        %v333 = vunpack.c.l.b16 %v248
        %v334 = vunpack.c.l.b16 %v249
        %v335 = vunpack.c.l.b16 %v250
        %v336 = vunpack.c.l.b16 %v251
        %v337 = vunpack.c.l.b16 %v252
        %v338 = vunpack.c.l.b16 %v253
        %v339 = vunpack.c.l.b16 %v254
        %v340 = vunpack.c.l.b16 %v255
        %v341 = vunpack.c.l.b16 %v256
        %v342 = vunpack.c.l.b16 %v257
        %v343 = vunpack.c.l.b16 %v258
        %v344 = vunpack.c.l.b16 %v259
        %v345 = vunpack.c.l.b16 %v260
        %v346 = vunpack.c.l.b16 %v261
        %v347 = vunpack.c.l.b16 %v262
        %v348 = vunpack.c.l.b16 %v263
        %v349 = vunpack.c.l.b16 %v264
        %v350 = vunpack.c.l.b16 %v265
        %v351 = vunpack.c.l.b16 %v266
        %v352 = vunpack.c.l.b16 %v267
        %v353 = vunpack.c.l.b16 %v268
        %v354 = vunpack.c.l.b16 %v269
        %v355 = vunpack.c.l.b16 %v270
        %v356 = vunpack.c.l.b16 %v271
        %v357 = vunpack.c.l.b16 %v272
        %v358 = vunpack.c.l.b16 %v273
        %v359 = vunpack.c.l.b16 %v274
        %v360 = vunpack.c.l.b16 %v275
        %v361 = vunpack.c.l.b16 %v276
        %v362 = vunpack.c.l.b16 %v277
        %v363 = vpack.c.b16 %v332, %v331
        %v364 = vpack.c.b16 %v334, %v333
        %v365 = vpack.c.b16 %v336, %v335
        %v366 = vpack.c.b16 %v338, %v337
        %v367 = vpack.c.b16 %v340, %v339
        %v368 = vpack.c.b16 %v342, %v341
        %v369 = vpack.c.b16 %v344, %v343
        %v370 = vpack.c.b16 %v346, %v345
        %v371 = vpack.c.b16 %v348, %v347
        %v372 = vpack.c.b16 %v350, %v349
        %v373 = vpack.c.b16 %v352, %v351
        %v374 = vpack.c.b16 %v354, %v353
        %v375 = vpack.c.b16 %v356, %v355
        %v376 = vpack.c.b16 %v358, %v357
        %v377 = vpack.c.b16 %v360, %v359
        %v378 = vpack.c.b16 %v362, %v361
        %395 = vmatprep.subr.bf16.mxu0 0
        %396 = vmatpush1.bf16.msra.mxu0 %v370
        %397 = vmatprep.subr.bf16.mxu0 0
        %398 = vmatpush1.bf16.msra.mxu0 %v369
        %399 = vmatprep.subr.bf16.mxu0 0
        %400 = vmatpush1.bf16.msra.mxu0 %v368
        %401 = vmatprep.subr.bf16.mxu0 0
        %402 = vmatpush1.bf16.msra.mxu0 %v367
        %403 = vmatprep.subr.bf16.mxu0 0
        %404 = vmatpush1.bf16.msra.mxu0 %v366
        %405 = vmatprep.subr.bf16.mxu0 0
        %406 = vmatpush1.bf16.msra.mxu0 %v365
        %407 = vmatprep.subr.bf16.mxu0 0
        %408 = vmatpush1.bf16.msra.mxu0 %v364
        %409 = vmatprep.subr.bf16.mxu0 0
        %410 = vmatpush1.bf16.msra.mxu0 %v363
        %411 = vmatprep.subr.bf16.mxu0 0
        %412 = vmatpush2.bf16.msra.mxu0 %v378
        %413 = vmatprep.subr.bf16.mxu0 0
        %414 = vmatpush2.bf16.msra.mxu0 %v377
        %415 = vmatprep.subr.bf16.mxu0 0
        %416 = vmatpush2.bf16.msra.mxu0 %v376
        %417 = vmatprep.subr.bf16.mxu0 0
        %418 = vmatpush2.bf16.msra.mxu0 %v375
        %419 = vmatprep.subr.bf16.mxu0 0
        %420 = vmatpush2.bf16.msra.mxu0 %v374
        %421 = vmatprep.subr.bf16.mxu0 0
        %422 = vmatpush2.bf16.msra.mxu0 %v373
        %423 = vmatprep.subr.bf16.mxu0 0
        %424 = vmatpush2.bf16.msra.mxu0 %v372
        %425 = vmatprep.subr.bf16.mxu0 0
        %426 = vmatpush2.bf16.msra.mxu0 %v371
        %427 = vmatprep.mubr.bf16.mxu0 %v296
        %428 = vmatmul.mubr.bf16.gmra.mxu0 %v295
        %v429 = vpop.f32.mrf.mxu0
        %v430 = vadd.f32 %v287, %v429
        %v431 = vpop.f32.mrf.mxu0
        %v432 = vpop.f32.mrf.mxu0
        %v433 = vadd.f32 %v287, %v432
        %v434 = vpop.f32.mrf.mxu0
        %435 = vdwg.mxu0
        %436 = vmax.xlane.f32.xlu0 %v430
        %v437 = vpop.xlane.xlu0 %436
        %438 = vmax.xlane.f32.xlu0 %v433
        %v439 = vpop.xlane.xlu0 %438
        %v440 = vsub.f32 %v430, %v437
        %v441 = vsub.f32 %v433, %v439
        %v442 = vmul.f32 %v440, 1.442695
        %v443 = vpow.pop %v442
        %v444 = vmul.f32 %v441, 1.442695
        %v445 = vpow.pop %v444
        %446 = vadd.xlane.f32.xlu0 %v443
        %v447 = vpop.xlane.xlu0 %446
        %448 = vadd.xlane.f32.xlu0 %v445
        %v449 = vpop.xlane.xlu0 %448
        %v450 = vlaneseq
        %v451 = vand.u32 %v450, 127
        %452 = vset.pattern.permute.xlu0 0
        %453 = vperm.xlu0 %452, %v281
        %v454 = vpop.permute.xlu0 %453
        %455 = vset.pattern.permute.xlu0 0
        %456 = vperm.xlu0 %455, %v282
        %v457 = vpop.permute.xlu0 %456
        %vm458 = vcmp.eq.s32.totalorder %v451, %v454
        %vm459 = vcmp.eq.s32.totalorder %v451, %v457
        %v460 = vsel %vm458, %v430, 0.0
        %v461 = vsel %vm459, %v433, 0.0
        %462 = vadd.xlane.f32.xlu0 %v460
        %v463 = vpop.xlane.xlu0 %462
        %464 = vadd.xlane.f32.xlu0 %v461
        %v465 = vpop.xlane.xlu0 %464
        %v466 = vld [vmem:[#allocation2] sm:$0xff]
        %v467 = vld [vmem:[#allocation2 + $0x8] sm:$0xff]
        %v468 = vlog2.pop %v447
        %v469 = vmul.f32 %v468, 0.6931472
        %v470 = vlog2.pop %v449
        %v471 = vmul.f32 %v470, 0.6931472
        %v472 = vadd.f32 %v437, %v469
        %v473 = vadd.f32 %v439, %v471
        %v474 = vsub.f32 %v472, %v463
        %v475 = vsub.f32 %v473, %v465
        %v476 = vadd.f32 %v466, %v474
        %v477 = vadd.f32 %v467, %v475
        %vm478 = vcmask 7168
        %479 = vst.msk [vmem:[#allocation2] sm:$0xff] %vm478, %v476
        %480 = vst.msk [vmem:[#allocation2 + $0x8] sm:$0xff] %vm478, %v477
        %v481 = vrcp.pop %v447
        %v482 = vrcp.pop %v449
        %v483 = vmul.f32 %v481, 0.03125
        %v484 = vmul.f32 %v482, 0.03125
        %v485 = vmul.f32 %v443, %v483
        %v486 = vmul.f32 %v445, %v484
        %v487 = vsel %vm458, 0.03125, 0.0
        %v488 = vsel %vm459, 0.03125, 0.0
        %v489 = vsub.f32 %v485, %v487
        %v490 = vsub.f32 %v486, %v488
        %v491 = vld [vmem:[#allocation3] sm:$0xff]
        %v492 = vld [vmem:[#allocation3 + $0x8] sm:$0xff]
        %v493 = vld [vmem:[#allocation3 + $0x10] sm:$0xff]
        %v494 = vld [vmem:[#allocation3 + $0x18] sm:$0xff]
        %v495 = vld [vmem:[#allocation3 + $0x20] sm:$0xff]
        %v496 = vld [vmem:[#allocation3 + $0x28] sm:$0xff]
        %v497 = vld [vmem:[#allocation3 + $0x30] sm:$0xff]
        %v498 = vld [vmem:[#allocation3 + $0x38] sm:$0xff]
        %v499 = vld [vmem:[#allocation3 + $0x40] sm:$0xff]
        %v500 = vld [vmem:[#allocation3 + $0x48] sm:$0xff]
        %v501 = vld [vmem:[#allocation3 + $0x50] sm:$0xff]
        %v502 = vld [vmem:[#allocation3 + $0x58] sm:$0xff]
        %v503 = vld [vmem:[#allocation3 + $0x60] sm:$0xff]
        %v504 = vld [vmem:[#allocation3 + $0x68] sm:$0xff]
        %v505 = vld [vmem:[#allocation3 + $0x70] sm:$0xff]
        %v506 = vld [vmem:[#allocation3 + $0x78] sm:$0xff]
        %v507 = vld [vmem:[#allocation3 + $0x80] sm:$0xff]
        %v508 = vld [vmem:[#allocation3 + $0x88] sm:$0xff]
        %v509 = vld [vmem:[#allocation3 + $0x90] sm:$0xff]
        %v510 = vld [vmem:[#allocation3 + $0x98] sm:$0xff]
        %v511 = vld [vmem:[#allocation3 + $0xa0] sm:$0xff]
        %v512 = vld [vmem:[#allocation3 + $0xa8] sm:$0xff]
        %v513 = vld [vmem:[#allocation3 + $0xb0] sm:$0xff]
        %v514 = vld [vmem:[#allocation3 + $0xb8] sm:$0xff]
        %v515 = vld [vmem:[#allocation3 + $0xc0] sm:$0xff]
        %v516 = vld [vmem:[#allocation3 + $0xc8] sm:$0xff]
        %v517 = vld [vmem:[#allocation3 + $0xd0] sm:$0xff]
        %v518 = vld [vmem:[#allocation3 + $0xd8] sm:$0xff]
        %v519 = vld [vmem:[#allocation3 + $0xe0] sm:$0xff]
        %v520 = vld [vmem:[#allocation3 + $0xe8] sm:$0xff]
        %v521 = vld [vmem:[#allocation3 + $0xf0] sm:$0xff]
        %v522 = vld [vmem:[#allocation3 + $0xf8] sm:$0xff]
        %v523 = vpack.c.bf16 %v490, %v489
        %524 = vxpose.xlu0.c.b16.start [1/8] %v295, 128
        %525 = vxpose.xlu0.c.b16.cont [2/8] 0, 128
        %526 = vxpose.xlu0.c.b16.cont [3/8] 0, 128
        %527 = vxpose.xlu0.c.b16.cont [4/8] 0, 128
        %528 = vxpose.xlu0.c.b16.cont [5/8] 0, 128
        %529 = vxpose.xlu0.c.b16.cont [6/8] 0, 128
        %530 = vxpose.xlu0.c.b16.cont [7/8] 0, 128
        %531 = vxpose.xlu0.c.b16.end [8/8] 0, 128
        %v532 = vpop.trf.xlu0
        %v533 = vpop.trf.xlu0
        %v534 = vpop.trf.xlu0
        %v535 = vpop.trf.xlu0
        %v536 = vpop.trf.xlu0
        %v537 = vpop.trf.xlu0
        %v538 = vpop.trf.xlu0
        %v539 = vpop.trf.xlu0
        %540 = vxpose.xlu0.c.b16.start [1/8] %v296, 128
        %541 = vxpose.xlu0.c.b16.cont [2/8] 0, 128
        %542 = vxpose.xlu0.c.b16.cont [3/8] 0, 128
        %543 = vxpose.xlu0.c.b16.cont [4/8] 0, 128
        %544 = vxpose.xlu0.c.b16.cont [5/8] 0, 128
        %545 = vxpose.xlu0.c.b16.cont [6/8] 0, 128
        %546 = vxpose.xlu0.c.b16.cont [7/8] 0, 128
        %547 = vxpose.xlu0.c.b16.end [8/8] 0, 128
        %v548 = vpop.trf.xlu0
        %v549 = vpop.trf.xlu0
        %v550 = vpop.trf.xlu0
        %v551 = vpop.trf.xlu0
        %v552 = vpop.trf.xlu0
        %v553 = vpop.trf.xlu0
        %v554 = vpop.trf.xlu0
        %v555 = vpop.trf.xlu0
        %vm556 = vcmask 130048
        %v558 = vsel %vm556, %v532, 0
        %v561 = vsel %vm556, %v533, 0
        %v564 = vsel %vm556, %v534, 0
        %v567 = vsel %vm556, %v535, 0
        %v570 = vsel %vm556, %v536, 0
        %v573 = vsel %vm556, %v537, 0
        %v576 = vsel %vm556, %v538, 0
        %v579 = vsel %vm556, %v539, 0
        %v582 = vsel %vm556, %v548, 0
        %v585 = vsel %vm556, %v549, 0
        %v588 = vsel %vm556, %v550, 0
        %v591 = vsel %vm556, %v551, 0
        %v594 = vsel %vm556, %v552, 0
        %v597 = vsel %vm556, %v553, 0
        %v600 = vsel %vm556, %v554, 0
        %v603 = vsel %vm556, %v555, 0
        %605 = vmatprep.subr.bf16.mxu0 0
        %606 = vmatpush1.bf16.msra.mxu0 0
        %607 = vmatprep.subr.bf16.mxu0 0
        %608 = vmatpush1.bf16.msra.mxu0 0
        %609 = vmatprep.subr.bf16.mxu0 0
        %610 = vmatpush1.bf16.msra.mxu0 0
        %611 = vmatprep.subr.bf16.mxu0 0
        %612 = vmatpush1.bf16.msra.mxu0 0
        %613 = vmatprep.subr.bf16.mxu0 0
        %614 = vmatpush1.bf16.msra.mxu0 0
        %615 = vmatprep.subr.bf16.mxu0 0
        %616 = vmatpush1.bf16.msra.mxu0 0
        %617 = vmatprep.subr.bf16.mxu0 0
        %618 = vmatpush1.bf16.msra.mxu0 0
        %619 = vmatprep.subr.bf16.mxu0 0
        %620 = vmatpush1.bf16.msra.mxu0 %v523
        %621 = vmatprep.subr.bf16.mxu0 0
        %622 = vmatpush2.bf16.msra.mxu0 0
        %623 = vmatprep.subr.bf16.mxu0 0
        %624 = vmatpush2.bf16.msra.mxu0 0
        %625 = vmatprep.subr.bf16.mxu0 0
        %626 = vmatpush2.bf16.msra.mxu0 0
        %627 = vmatprep.subr.bf16.mxu0 0
        %628 = vmatpush2.bf16.msra.mxu0 0
        %629 = vmatprep.subr.bf16.mxu0 0
        %630 = vmatpush2.bf16.msra.mxu0 0
        %631 = vmatprep.subr.bf16.mxu0 0
        %632 = vmatpush2.bf16.msra.mxu0 0
        %633 = vmatprep.subr.bf16.mxu0 0
        %634 = vmatpush2.bf16.msra.mxu0 0
        %635 = vmatprep.subr.bf16.mxu0 0
        %636 = vmatpush2.bf16.msra.mxu0 0
        %637 = vmatprep.mubr.bf16.mxu0 0
        %638 = vmatmul.mubr.bf16.gmra.mxu0 %v558
        %v639 = vpop.f32.mrf.mxu0
        %v640 = vadd.f32 0.0, %v639
        %v641 = vpop.f32.mrf.mxu0
        %v642 = vpop.f32.mrf.mxu0
        %v643 = vadd.f32 0.0, %v642
        %v644 = vpop.f32.mrf.mxu0
        %645 = vmatprep.mubr.bf16.mxu0 0
        %646 = vmatmul.mubr.bf16.gmra.mxu0 %v561
        %v647 = vpop.f32.mrf.mxu0
        %v648 = vadd.f32 0.0, %v647
        %v649 = vpop.f32.mrf.mxu0
        %v650 = vpop.f32.mrf.mxu0
        %v651 = vadd.f32 0.0, %v650
        %v652 = vpop.f32.mrf.mxu0
        %653 = vmatprep.mubr.bf16.mxu0 0
        %654 = vmatmul.mubr.bf16.gmra.mxu0 %v564
        %v655 = vpop.f32.mrf.mxu0
        %v656 = vadd.f32 0.0, %v655
        %v657 = vpop.f32.mrf.mxu0
        %v658 = vpop.f32.mrf.mxu0
        %v659 = vadd.f32 0.0, %v658
        %v660 = vpop.f32.mrf.mxu0
        %661 = vmatprep.mubr.bf16.mxu0 0
        %662 = vmatmul.mubr.bf16.gmra.mxu0 %v567
        %v663 = vpop.f32.mrf.mxu0
        %v664 = vadd.f32 0.0, %v663
        %v665 = vpop.f32.mrf.mxu0
        %v666 = vpop.f32.mrf.mxu0
        %v667 = vadd.f32 0.0, %v666
        %v668 = vpop.f32.mrf.mxu0
        %669 = vmatprep.mubr.bf16.mxu0 0
        %670 = vmatmul.mubr.bf16.gmra.mxu0 %v570
        %v671 = vpop.f32.mrf.mxu0
        %v672 = vadd.f32 0.0, %v671
        %v673 = vpop.f32.mrf.mxu0
        %v674 = vpop.f32.mrf.mxu0
        %v675 = vadd.f32 0.0, %v674
        %v676 = vpop.f32.mrf.mxu0
        %677 = vmatprep.mubr.bf16.mxu0 0
        %678 = vmatmul.mubr.bf16.gmra.mxu0 %v573
        %v679 = vpop.f32.mrf.mxu0
        %v680 = vadd.f32 0.0, %v679
        %v681 = vpop.f32.mrf.mxu0
        %v682 = vpop.f32.mrf.mxu0
        %v683 = vadd.f32 0.0, %v682
        %v684 = vpop.f32.mrf.mxu0
        %685 = vmatprep.mubr.bf16.mxu0 0
        %686 = vmatmul.mubr.bf16.gmra.mxu0 %v576
        %v687 = vpop.f32.mrf.mxu0
        %v688 = vadd.f32 0.0, %v687
        %v689 = vpop.f32.mrf.mxu0
        %v690 = vpop.f32.mrf.mxu0
        %v691 = vadd.f32 0.0, %v690
        %v692 = vpop.f32.mrf.mxu0
        %693 = vmatprep.mubr.bf16.mxu0 0
        %694 = vmatmul.mubr.bf16.gmra.mxu0 %v579
        %v695 = vpop.f32.mrf.mxu0
        %v696 = vadd.f32 0.0, %v695
        %v697 = vpop.f32.mrf.mxu0
        %v698 = vpop.f32.mrf.mxu0
        %v699 = vadd.f32 0.0, %v698
        %v700 = vpop.f32.mrf.mxu0
        %701 = vmatprep.mubr.bf16.mxu0 0
        %702 = vmatmul.mubr.bf16.gmra.mxu0 %v582
        %v703 = vpop.f32.mrf.mxu0
        %v704 = vadd.f32 0.0, %v703
        %v705 = vpop.f32.mrf.mxu0
        %v706 = vpop.f32.mrf.mxu0
        %v707 = vadd.f32 0.0, %v706
        %v708 = vpop.f32.mrf.mxu0
        %709 = vmatprep.mubr.bf16.mxu0 0
        %710 = vmatmul.mubr.bf16.gmra.mxu0 %v585
        %v711 = vpop.f32.mrf.mxu0
        %v712 = vadd.f32 0.0, %v711
        %v713 = vpop.f32.mrf.mxu0
        %v714 = vpop.f32.mrf.mxu0
        %v715 = vadd.f32 0.0, %v714
        %v716 = vpop.f32.mrf.mxu0
        %717 = vmatprep.mubr.bf16.mxu0 0
        %718 = vmatmul.mubr.bf16.gmra.mxu0 %v588
        %v719 = vpop.f32.mrf.mxu0
        %v720 = vadd.f32 0.0, %v719
        %v721 = vpop.f32.mrf.mxu0
        %v722 = vpop.f32.mrf.mxu0
        %v723 = vadd.f32 0.0, %v722
        %v724 = vpop.f32.mrf.mxu0
        %725 = vmatprep.mubr.bf16.mxu0 0
        %726 = vmatmul.mubr.bf16.gmra.mxu0 %v591
        %v727 = vpop.f32.mrf.mxu0
        %v728 = vadd.f32 0.0, %v727
        %v729 = vpop.f32.mrf.mxu0
        %v730 = vpop.f32.mrf.mxu0
        %v731 = vadd.f32 0.0, %v730
        %v732 = vpop.f32.mrf.mxu0
        %733 = vmatprep.mubr.bf16.mxu0 0
        %734 = vmatmul.mubr.bf16.gmra.mxu0 %v594
        %v735 = vpop.f32.mrf.mxu0
        %v736 = vadd.f32 0.0, %v735
        %v737 = vpop.f32.mrf.mxu0
        %v738 = vpop.f32.mrf.mxu0
        %v739 = vadd.f32 0.0, %v738
        %v740 = vpop.f32.mrf.mxu0
        %741 = vmatprep.mubr.bf16.mxu0 0
        %742 = vmatmul.mubr.bf16.gmra.mxu0 %v597
        %v743 = vpop.f32.mrf.mxu0
        %v744 = vadd.f32 0.0, %v743
        %v745 = vpop.f32.mrf.mxu0
        %v746 = vpop.f32.mrf.mxu0
        %v747 = vadd.f32 0.0, %v746
        %v748 = vpop.f32.mrf.mxu0
        %749 = vmatprep.mubr.bf16.mxu0 0
        %750 = vmatmul.mubr.bf16.gmra.mxu0 %v600
        %v751 = vpop.f32.mrf.mxu0
        %v752 = vadd.f32 0.0, %v751
        %v753 = vpop.f32.mrf.mxu0
        %v754 = vpop.f32.mrf.mxu0
        %v755 = vadd.f32 0.0, %v754
        %v756 = vpop.f32.mrf.mxu0
        %757 = vmatprep.mubr.bf16.mxu0 0
        %758 = vmatmul.mubr.bf16.gmra.mxu0 %v603
        %v759 = vpop.f32.mrf.mxu0
        %v760 = vadd.f32 0.0, %v759
        %v761 = vpop.f32.mrf.mxu0
        %v762 = vpop.f32.mrf.mxu0
        %v763 = vadd.f32 0.0, %v762
        %v764 = vpop.f32.mrf.mxu0
        %765 = vdwg.mxu0
        %v766 = vadd.f32 %v491, %v640
        %v767 = vadd.f32 %v492, %v643
        %v768 = vadd.f32 %v493, %v648
        %v769 = vadd.f32 %v494, %v651
        %v770 = vadd.f32 %v495, %v656
        %v771 = vadd.f32 %v496, %v659
        %v772 = vadd.f32 %v497, %v664
        %v773 = vadd.f32 %v498, %v667
        %v774 = vadd.f32 %v499, %v672
        %v775 = vadd.f32 %v500, %v675
        %v776 = vadd.f32 %v501, %v680
        %v777 = vadd.f32 %v502, %v683
        %v778 = vadd.f32 %v503, %v688
        %v779 = vadd.f32 %v504, %v691
        %v780 = vadd.f32 %v505, %v696
        %v781 = vadd.f32 %v506, %v699
        %v782 = vadd.f32 %v507, %v704
        %v783 = vadd.f32 %v508, %v707
        %v784 = vadd.f32 %v509, %v712
        %v785 = vadd.f32 %v510, %v715
        %v786 = vadd.f32 %v511, %v720
        %v787 = vadd.f32 %v512, %v723
        %v788 = vadd.f32 %v513, %v728
        %v789 = vadd.f32 %v514, %v731
        %v790 = vadd.f32 %v515, %v736
        %v791 = vadd.f32 %v516, %v739
        %v792 = vadd.f32 %v517, %v744
        %v793 = vadd.f32 %v518, %v747
        %v794 = vadd.f32 %v519, %v752
        %v795 = vadd.f32 %v520, %v755
        %v796 = vadd.f32 %v521, %v760
        %v797 = vadd.f32 %v522, %v763
        %798 = vst [vmem:[#allocation3] sm:$0xff] %v766
        %799 = vst [vmem:[#allocation3 + $0x8] sm:$0xff] %v767
        %800 = vst [vmem:[#allocation3 + $0x10] sm:$0xff] %v768
        %801 = vst [vmem:[#allocation3 + $0x18] sm:$0xff] %v769
        %802 = vst [vmem:[#allocation3 + $0x20] sm:$0xff] %v770
        %803 = vst [vmem:[#allocation3 + $0x28] sm:$0xff] %v771
        %804 = vst [vmem:[#allocation3 + $0x30] sm:$0xff] %v772
        %805 = vst [vmem:[#allocation3 + $0x38] sm:$0xff] %v773
        %806 = vst [vmem:[#allocation3 + $0x40] sm:$0xff] %v774
        %807 = vst [vmem:[#allocation3 + $0x48] sm:$0xff] %v775
        %808 = vst [vmem:[#allocation3 + $0x50] sm:$0xff] %v776
        %809 = vst [vmem:[#allocation3 + $0x58] sm:$0xff] %v777
        %810 = vst [vmem:[#allocation3 + $0x60] sm:$0xff] %v778
        %811 = vst [vmem:[#allocation3 + $0x68] sm:$0xff] %v779
        %812 = vst [vmem:[#allocation3 + $0x70] sm:$0xff] %v780
        %813 = vst [vmem:[#allocation3 + $0x78] sm:$0xff] %v781
        %814 = vst [vmem:[#allocation3 + $0x80] sm:$0xff] %v782
        %815 = vst [vmem:[#allocation3 + $0x88] sm:$0xff] %v783
        %816 = vst [vmem:[#allocation3 + $0x90] sm:$0xff] %v784
        %817 = vst [vmem:[#allocation3 + $0x98] sm:$0xff] %v785
        %818 = vst [vmem:[#allocation3 + $0xa0] sm:$0xff] %v786
        %819 = vst [vmem:[#allocation3 + $0xa8] sm:$0xff] %v787
        %820 = vst [vmem:[#allocation3 + $0xb0] sm:$0xff] %v788
        %821 = vst [vmem:[#allocation3 + $0xb8] sm:$0xff] %v789
        %822 = vst [vmem:[#allocation3 + $0xc0] sm:$0xff] %v790
        %823 = vst [vmem:[#allocation3 + $0xc8] sm:$0xff] %v791
        %824 = vst [vmem:[#allocation3 + $0xd0] sm:$0xff] %v792
        %825 = vst [vmem:[#allocation3 + $0xd8] sm:$0xff] %v793
        %826 = vst [vmem:[#allocation3 + $0xe0] sm:$0xff] %v794
        %827 = vst [vmem:[#allocation3 + $0xe8] sm:$0xff] %v795
        %828 = vst [vmem:[#allocation3 + $0xf0] sm:$0xff] %v796
        %829 = vst [vmem:[#allocation3 + $0xf8] sm:$0xff] %v797
        %p830 = scmp.eq.s32.totalorder %s17, 1
        // Predicated region
        $region45: #{tpu_custom_call.1} parent=35 // pred_check
          %p831 = pneg %p830
        $region46: #{tpu_custom_call.1} parent=35 // pred_check_branch
          %833 = sbr.rel (%p831) target = $region48
        $region47: #{tpu_custom_call.1} parent=35 // pred_region
          %v834 = vld [vmem:[#allocation3] sm:$0xff]
          %v835 = vld [vmem:[#allocation3 + $0x8] sm:$0xff]
          %v836 = vld [vmem:[#allocation3 + $0x10] sm:$0xff]
          %v837 = vld [vmem:[#allocation3 + $0x18] sm:$0xff]
          %v838 = vld [vmem:[#allocation3 + $0x20] sm:$0xff]
          %v839 = vld [vmem:[#allocation3 + $0x28] sm:$0xff]
          %v840 = vld [vmem:[#allocation3 + $0x30] sm:$0xff]
          %v841 = vld [vmem:[#allocation3 + $0x38] sm:$0xff]
          %v842 = vld [vmem:[#allocation3 + $0x40] sm:$0xff]
          %v843 = vld [vmem:[#allocation3 + $0x48] sm:$0xff]
          %v844 = vld [vmem:[#allocation3 + $0x50] sm:$0xff]
          %v845 = vld [vmem:[#allocation3 + $0x58] sm:$0xff]
          %v846 = vld [vmem:[#allocation3 + $0x60] sm:$0xff]
          %v847 = vld [vmem:[#allocation3 + $0x68] sm:$0xff]
          %v848 = vld [vmem:[#allocation3 + $0x70] sm:$0xff]
          %v849 = vld [vmem:[#allocation3 + $0x78] sm:$0xff]
          %v850 = vld [vmem:[#allocation3 + $0x80] sm:$0xff]
          %v851 = vld [vmem:[#allocation3 + $0x88] sm:$0xff]
          %v852 = vld [vmem:[#allocation3 + $0x90] sm:$0xff]
          %v853 = vld [vmem:[#allocation3 + $0x98] sm:$0xff]
          %v854 = vld [vmem:[#allocation3 + $0xa0] sm:$0xff]
          %v855 = vld [vmem:[#allocation3 + $0xa8] sm:$0xff]
          %v856 = vld [vmem:[#allocation3 + $0xb0] sm:$0xff]
          %v857 = vld [vmem:[#allocation3 + $0xb8] sm:$0xff]
          %v858 = vld [vmem:[#allocation3 + $0xc0] sm:$0xff]
          %v859 = vld [vmem:[#allocation3 + $0xc8] sm:$0xff]
          %v860 = vld [vmem:[#allocation3 + $0xd0] sm:$0xff]
          %v861 = vld [vmem:[#allocation3 + $0xd8] sm:$0xff]
          %v862 = vld [vmem:[#allocation3 + $0xe0] sm:$0xff]
          %v863 = vld [vmem:[#allocation3 + $0xe8] sm:$0xff]
          %v864 = vld [vmem:[#allocation3 + $0xf0] sm:$0xff]
          %v865 = vld [vmem:[#allocation3 + $0xf8] sm:$0xff]
          %v866 = vmul.f32 %v834, %v834
          %v867 = vmul.f32 %v835, %v835
          %v868 = vmul.f32 %v836, %v836
          %v869 = vmul.f32 %v837, %v837
          %v870 = vmul.f32 %v838, %v838
          %v871 = vmul.f32 %v839, %v839
          %v872 = vmul.f32 %v840, %v840
          %v873 = vmul.f32 %v841, %v841
          %v874 = vmul.f32 %v842, %v842
          %v875 = vmul.f32 %v843, %v843
          %v876 = vmul.f32 %v844, %v844
          %v877 = vmul.f32 %v845, %v845
          %v878 = vmul.f32 %v846, %v846
          %v879 = vmul.f32 %v847, %v847
          %v880 = vmul.f32 %v848, %v848
          %v881 = vmul.f32 %v849, %v849
          %v882 = vmul.f32 %v850, %v850
          %v883 = vmul.f32 %v851, %v851
          %v884 = vmul.f32 %v852, %v852
          %v885 = vmul.f32 %v853, %v853
          %v886 = vmul.f32 %v854, %v854
          %v887 = vmul.f32 %v855, %v855
          %v888 = vmul.f32 %v856, %v856
          %v889 = vmul.f32 %v857, %v857
          %v890 = vmul.f32 %v858, %v858
          %v891 = vmul.f32 %v859, %v859
          %v892 = vmul.f32 %v860, %v860
          %v893 = vmul.f32 %v861, %v861
          %v894 = vmul.f32 %v862, %v862
          %v895 = vmul.f32 %v863, %v863
          %v896 = vmul.f32 %v864, %v864
          %v897 = vmul.f32 %v865, %v865
          %v898 = vadd.f32 %v866, %v867
          %v899 = vadd.f32 %v898, %v868
          %v900 = vadd.f32 %v899, %v869
          %v901 = vadd.f32 %v900, %v870
          %v902 = vadd.f32 %v901, %v871
          %v903 = vadd.f32 %v902, %v872
          %v904 = vadd.f32 %v903, %v873
          %v905 = vadd.f32 %v904, %v874
          %v906 = vadd.f32 %v905, %v875
          %v907 = vadd.f32 %v906, %v876
          %v908 = vadd.f32 %v907, %v877
          %v909 = vadd.f32 %v908, %v878
          %v910 = vadd.f32 %v909, %v879
          %v911 = vadd.f32 %v910, %v880
          %v912 = vadd.f32 %v911, %v881
          %v913 = vadd.f32 %v912, %v882
          %v914 = vadd.f32 %v913, %v883
          %v915 = vadd.f32 %v914, %v884
          %v916 = vadd.f32 %v915, %v885
          %v917 = vadd.f32 %v916, %v886
          %v918 = vadd.f32 %v917, %v887
          %v919 = vadd.f32 %v918, %v888
          %v920 = vadd.f32 %v919, %v889
          %v921 = vadd.f32 %v920, %v890
          %v922 = vadd.f32 %v921, %v891
          %v923 = vadd.f32 %v922, %v892
          %v924 = vadd.f32 %v923, %v893
          %v925 = vadd.f32 %v924, %v894
          %v926 = vadd.f32 %v925, %v895
          %v927 = vadd.f32 %v926, %v896
          %v928 = vadd.f32 %v927, %v897
          %929 = vadd.xlane.f32.xlu0 %v928
          %v930 = vpop.xlane.xlu0 %929
          %v931 = vrot.slane %v930, 4
          %v932 = vadd.f32 %v930, %v931
          %v933 = vrot.slane %v932, 2
          %v934 = vadd.f32 %v932, %v933
          %v935 = vrot.slane %v934, 1
          %v936 = vadd.f32 %v934, %v935
          %s937 = vtos %v936
          %v938 = vld [vmem:[#allocation2] sm:$0xff]
          %v939 = vld [vmem:[#allocation2 + $0x8] sm:$0xff]
          %v940 = vsel %vm478, %v938, 0.0
          %v941 = vsel %vm478, %v939, 0.0
          %v942 = vadd.f32 %v940, %v941
          %v943 = vrot.slane %v942, 4
          %v944 = vadd.f32 %v942, %v943
          %v945 = vrot.slane %v944, 2
          %v946 = vadd.f32 %v944, %v945
          %v947 = vrot.slane %v946, 1
          %v948 = vadd.f32 %v946, %v947
          %v949 = vmul.f32 %v948, 0.03125
          %s950 = smul.f32 %s937, 0.1
          %v951 = vstv %s950
          %v952 = vadd.f32 %v949, %v951
          %vm953 = vcmask 0
          %954 = vst.msk [vmem:[#allocation7] sm:$0x1] %vm953, %v952
        $region48: #{tpu_custom_call.1} parent=35 // pred_fallthru
          _
        // Predicated region
        $region49: #{tpu_custom_call.1} parent=35 // pred_check
          %p955 = pneg %p119
        $region50: #{tpu_custom_call.1} parent=35 // pred_check_branch
          %957 = sbr.rel (%p955) target = $region52
        $region51: #{tpu_custom_call.1} parent=35 // pred_region
          %s959 = ssub.s32 16, 16
          %960 = vsyncadd [#allocation6], %s959
          %s962 = sshll.u32 [#allocation7], 4
          %s963 = int_to_ptr.vmem [resolvable:$true] %s962
          %965 = dma.vmem_to_hbm [thread:$0]  %s963, 16, %s4, [#allocation6]
        $region52: #{tpu_custom_call.1} parent=35 // pred_fallthru
          _
        // Predicated region
        $region53: #{tpu_custom_call.1} parent=35 // pred_check
          %p966 = pneg %p119
        $region54: #{tpu_custom_call.1} parent=35 // pred_check_branch
          %968 = sbr.rel (%p966) target = $region56
        $region55: #{tpu_custom_call.1} parent=35 // pred_region
          %969 = dma.done [#allocation6], 16
        $region56: #{tpu_custom_call.1} parent=35 // pred_fallthru
          _
      $region36: #{tpu_custom_call.1} parent=5 // pred_fallthru
        _
      %p970 = scmp.le.s32.totalorder 2, %s12
      // Predicated region
      $region57: #{tpu_custom_call.1} parent=5 // pred_check
        %p971 = pneg %p970
      $region58: #{tpu_custom_call.1} parent=5 // pred_check_branch
        %973 = sbr.rel (%p971) target = $region60
      $region59: #{tpu_custom_call.1} parent=5 // pred_region
        %s974 = ssub.s32 %s12, 2
      $region60: #{tpu_custom_call.1} parent=5 // pred_fallthru
        _
    $region6: #{tpu_custom_call.1} parent=1 // loop_footer
      %s16 = sadd.s32 1, %s12
    $region7: #{tpu_custom_call.1} parent=1 // loop_footer_branch
      %11 = sbr.rel target = $region3
    $region8: #{tpu_custom_call.1} parent=1 // loop_exit
      _
    %975 = vsyncpa [#allocation5], 1
    %s976 = scalar_lea.sflag [#allocation5], 1
    %977 = vsyncpa %s976, 1
    %978 = vsyncpa [#allocation6], 1
    %s979 = scalar_lea.sflag [#allocation6], 1
    %980 = vsyncpa %s979, 1

</llo_original>
